<compile_context>
chip_gen: v5e
topology: v5e:2x2
jax: 0.10.0
libtpu: 0.0.40
codegen_flags: <defaults>
</compile_context>

<pallas_src>
import functools

import jax
import jax.numpy as jnp
from jax.experimental import pallas as pl
from jax.experimental.pallas import tpu as pltpu


def _round_up(x, m):
    return (x + m - 1) // m * m


def _num_tensorcores_per_chip():
    """2 on v7x (two TensorCores per chip), else 1 (v5e/v6e)."""
    try:
        kind = jax.devices()[0].device_kind.lower()
        if "v7" in kind or "7x" in kind:
            return 2
    except Exception:
        pass
    return 1


def _grouped_linear_kernel_grid(x_ref, wt_ref, b_ref, y_ref):
    """Grid = (G, M, N, K), K innermost ("arbitrary").

    x_ref : [tm, tk]  activations
    wt_ref: [tk, tn]  weights pre-transposed to [in, out] (no in-kernel .T)
    b_ref : [1,  tn]  bias (pre-padded)
    y_ref : [tm, tn]  f32 output tile == accumulator (no VMEM scratch):
            initialized with the broadcast bias at k==0, then each K step
            adds one MXU partial product; no epilogue copy.
    """
    @pl.when(pl.program_id(3) == 0)
    def _():
        y_ref[...] = jnp.broadcast_to(b_ref[...], y_ref.shape)

    y_ref[...] += jnp.dot(
        x_ref[...], wt_ref[...], preferred_element_type=jnp.float32
    )


def _grouped_linear_kernel_folded(x_ref, wt_ref, b_ref, y_ref):
    """Grid = (M, N, K): both groups done inside one step (single-TC chips).

    x_ref : [G, tm, tk], wt_ref: [G, tk, tn], b_ref: [G, 1, tn],
    y_ref : [G, tm, tn] f32 accumulator (bias-initialized at k==0).
    """
    @pl.when(pl.program_id(2) == 0)
    def _():
        y_ref[...] = jnp.broadcast_to(b_ref[...], y_ref.shape)

    # Batched (G=2) matmul -> two MXU calls per step, f32 accumulate.
    y_ref[...] += jnp.einsum(
        "gmk,gkn->gmn", x_ref[...], wt_ref[...],
        preferred_element_type=jnp.float32,
    )


@functools.partial(
    jax.jit, static_argnames=("out_n", "tm", "tn", "tk", "fold_groups")
)
def grouped_linear(x1, x2, wt_pad, b_pad, *, out_n, tm, tn, tk, fold_groups):
    """Fused y[g] = x[g] @ wT[g] + b[g] for both groups in ONE pallas_call.

    x1, x2 : [B, K]      activations (stacked + padded inside this jit)
    wt_pad : [G, k_pad, n_pad]  weights, pre-transposed AND pre-padded at init
    b_pad  : [G, 1, n_pad]      bias, pre-padded at init
    returns: [G, B, out_n]
    """
    B, K = x1.shape
    G, k_pad, n_pad = wt_pad.shape

    # Sublane-aligned M tile; N/K tiles were fixed at init (lane-dense).
    tm = min(tm, _round_up(B, 8))
    m_pad = _round_up(B, tm)

    x_stack = jnp.stack([x1, x2])                       # [G, B, K]
    if (m_pad, k_pad) != (B, K):
        # Zero K-padding contributes nothing; padded M rows are sliced off.
        x_stack = jnp.pad(x_stack, ((0, 0), (0, m_pad - B), (0, k_pad - K)))

    cost = pl.CostEstimate(
        flops=2 * G * m_pad * n_pad * k_pad,
        transcendentals=0,
        bytes_accessed=4 * G * (m_pad * k_pad + k_pad * n_pad
                                + n_pad + m_pad * n_pad),
    )

    if fold_groups:
        # Single-TC chips (v5e/v6e): the grid is a serial loop, so put both
        # groups inside one step -> halves the number of grid steps.
        grid = (m_pad // tm, n_pad // tn, k_pad // tk)
        grid_spec = pltpu.PrefetchScalarGridSpec(
            num_scalar_prefetch=0,
            grid=grid,
            in_specs=[
                pl.BlockSpec((G, tm, tk), lambda i, j, k: (0, i, k)),
                pl.BlockSpec((G, tk, tn), lambda i, j, k: (0, k, j)),
                pl.BlockSpec((G, 1, tn), lambda i, j, k: (0, 0, j)),
            ],
            out_specs=pl.BlockSpec((G, tm, tn), lambda i, j, k: (0, i, j)),
        )
        dims = ("parallel", "parallel", "arbitrary")
        kernel = _grouped_linear_kernel_folded
    else:
        # v7x (2 TensorCores): keep G as a leading "parallel" axis so each
        # core takes one group; M/N tiles also parallel, K last/"arbitrary".
        grid = (G, m_pad // tm, n_pad // tn, k_pad // tk)
        grid_spec = pltpu.PrefetchScalarGridSpec(
            num_scalar_prefetch=0,
            grid=grid,
            in_specs=[
                pl.BlockSpec((None, tm, tk), lambda g, i, j, k: (g, i, k)),
                pl.BlockSpec((None, tk, tn), lambda g, i, j, k: (g, k, j)),
                pl.BlockSpec((None, 1, tn), lambda g, i, j, k: (g, 0, j)),
            ],
            out_specs=pl.BlockSpec((None, tm, tn), lambda g, i, j, k: (g, i, j)),
        )
        dims = ("parallel", "parallel", "parallel", "arbitrary")
        kernel = _grouped_linear_kernel_grid

    y_p = pl.pallas_call(
        kernel,
        out_shape=jax.ShapeDtypeStruct((G, m_pad, n_pad), jnp.float32),
        grid_spec=grid_spec,
        compiler_params=pltpu.CompilerParams(
            dimension_semantics=dims,
            # Safe scoped-VMEM ceiling on every generation (v7x: 64 MiB
            # physical); the double-buffered tiles above use far less.
            vmem_limit_bytes=32 * 1024 * 1024,
        ),
        cost_estimate=cost,
    )(x_stack, wt_pad, b_pad)

    y = y_p
    if (m_pad, n_pad) != (B, out_n):
        y = y[:, :B, :out_n]
    if y.dtype != x1.dtype:
        y = y.astype(x1.dtype)
    return y


class GroupedFullyConnected:
    """JAX/Pallas port of the PyTorch GroupedFullyConnected module."""

    def __init__(self, in_size, out_size, stack=False, *, key, tn=256, tk=512):
        self.stack = stack
        self.in_size, self.out_size = in_size, out_size
        k1, k2, k3, k4 = jax.random.split(key, 4)
        # nn.Linear default init: U(-1/sqrt(in), 1/sqrt(in)) for W and b.
        bound = 1.0 / (in_size ** 0.5)
        w1 = jax.random.uniform(k1, (out_size, in_size), jnp.float32, -bound, bound)
        b1 = jax.random.uniform(k2, (out_size,), jnp.float32, -bound, bound)
        w2 = jax.random.uniform(k3, (out_size, in_size), jnp.float32, -bound, bound)
        b2 = jax.random.uniform(k4, (out_size,), jnp.float32, -bound, bound)
        # PyTorch-layout copies kept for reference checks.
        self.w1, self.b1, self.w2, self.b2 = w1, b1, w2, b2

        # Tile sizes along K (=in) / N (=out) fixed once at init; 256-wide N
        # tile feeds the full MXU width on v6e/v7x, clamped for tiny shapes.
        self.tn = min(tn, _round_up(out_size, 128))
        self.tk = min(tk, _round_up(in_size, 128))
        k_pad = _round_up(in_size, self.tk)
        n_pad = _round_up(out_size, self.tn)

        # Kernel-facing params: pre-transposed, stacked AND pre-padded ONCE at
        # init -> forward never pads/transposes the weights again.
        wt = jnp.stack([w1.T, w2.T])                           # [2, K, N]
        bb = jnp.stack([b1, b2]).reshape(2, 1, out_size)       # [2, 1, N]
        self.wt_pad = jnp.pad(
            wt, ((0, 0), (0, k_pad - in_size), (0, n_pad - out_size)))
        self.b_pad = jnp.pad(bb, ((0, 0), (0, 0), (0, n_pad - out_size)))

        # Fold the 2-group axis into the kernel on single-TC chips (v5e/v6e);
        # keep it as a "parallel" grid axis on 2-TC v7x.
        self.fold_groups = _num_tensorcores_per_chip() < 2

    def __call__(self, x1, x2):
        # The reference forward runs both linears and discards the results.
        # They are fused into one Pallas launch and returned as aux so the
        # kernel work is observable; module outputs are the passthroughs.
        y = grouped_linear(
            x1, x2, self.wt_pad, self.b_pad,
            out_n=self.out_size, tm=128, tn=self.tn, tk=self.tk,
            fold_groups=self.fold_groups,
        )
        y1, y2 = y[0], y[1]
        if self.stack:
            # Passthrough concat stays in XLA: x1/x2 are returned unchanged.
            out = (jnp.concatenate((x1, x2), axis=1), x2)
        else:
            out = (x1, x2)
        return out, (y1, y2)


if __name__ == "__main__":
    key = jax.random.PRNGKey(0)
    k_param, k_x1, k_x2, k_param2, k_a1, k_a2 = jax.random.split(key, 6)

    # --- small config (exercises K/N zero-padding to one aligned tile) ---
    batch, in_size, out_size = 8, 32, 16
    x1 = jax.random.normal(k_x1, (batch, in_size), jnp.float32)
    x2 = jax.random.normal(k_x2, (batch, in_size), jnp.float32)

    mod = GroupedFullyConnected(in_size, out_size, stack=False, key=k_param)
    (o1, o2), (y1, y2) = mod(x1, x2)
    jax.block_until_ready((o1, o2, y1, y2))
    assert o1.shape == (batch, in_size) and o2.shape == (batch, in_size)
    assert y1.shape == (batch, out_size) and y2.shape == (batch, out_size)
    # passthrough semantics
    assert bool(jnp.allclose(o1, x1)) and bool(jnp.allclose(o2, x2))
    # kernel correctness vs high-precision reference linear
    hp = jax.lax.Precision.HIGHEST
    ref1 = jnp.einsum("bk,kn->bn", x1, mod.w1.T, precision=hp) + mod.b1
    ref2 = jnp.einsum("bk,kn->bn", x2, mod.w2.T, precision=hp) + mod.b2
    assert bool(jnp.allclose(y1, ref1, atol=1e-4, rtol=1e-4))
    assert bool(jnp.allclose(y2, ref2, atol=1e-4, rtol=1e-4))

    # stack=True passthrough semantics
    mod_s = GroupedFullyConnected(in_size, out_size, stack=True, key=k_param)
    (s1, s2), (sy1, sy2) = mod_s(x1, x2)
    jax.block_until_ready((s1, s2, sy1, sy2))
    assert s1.shape == (batch, 2 * in_size) and s2.shape == (batch, in_size)
    assert bool(jnp.allclose(s1, jnp.concatenate((x1, x2), axis=1)))
    assert bool(jnp.allclose(sy1, ref1, atol=1e-4, rtol=1e-4))

    # --- larger config (no activation padding, no output slice needed) ---
    batch2, in2, out2 = 16, 512, 256
    a1 = jax.random.normal(k_a1, (batch2, in2), jnp.float32)
    a2 = jax.random.normal(k_a2, (batch2, in2), jnp.float32)
    mod2 = GroupedFullyConnected(in2, out2, stack=False, key=k_param2)
    (_, _), (z1, z2) = mod2(a1, a2)
    jax.block_until_ready((z1, z2))
    r1 = jnp.einsum("bk,kn->bn", a1, mod2.w1.T, precision=hp) + mod2.b1
    r2 = jnp.einsum("bk,kn->bn", a2, mod2.w2.T, precision=hp) + mod2.b2
    assert bool(jnp.allclose(z1, r1, atol=1e-3, rtol=1e-3))
    assert bool(jnp.allclose(z2, r2, atol=1e-3, rtol=1e-3))

    print("KERNEL_OK")
</pallas_src>

<mosaic_0001>
module attributes {stable_mosaic.version = 11 : i64} {
  func.func @_grouped_linear_kernel_folded(%arg0: i32, %arg1: i32, %arg2: i32, %arg3: memref<2x8x128xf32, #tpu.memory_space<vmem>>, %arg4: memref<2x128x128xf32, #tpu.memory_space<vmem>>, %arg5: memref<2x1x128xf32, #tpu.memory_space<vmem>>, %arg6: memref<2x8x128xf32, #tpu.memory_space<vmem>>) attributes {dimension_semantics = [#tpu.dimension_semantics<parallel>, #tpu.dimension_semantics<parallel>, #tpu.dimension_semantics<arbitrary>], iteration_bounds = array<i64: 1, 1, 1>, scalar_prefetch = 0 : i64, scratch_operands = 0 : i64, tpu.core_type = #tpu.core_type<tc>, window_params = [{transform_indices = @transform_0, window_bounds = array<i64: 2, 8, 128>}, {transform_indices = @transform_1, window_bounds = array<i64: 2, 128, 128>}, {transform_indices = @transform_2, window_bounds = array<i64: 2, 1, 128>}, {transform_indices = @transform_3, window_bounds = array<i64: 2, 8, 128>}]} {
    %c0_i32 = arith.constant 0 : i32
    %0 = arith.cmpi eq, %arg2, %c0_i32 : i32
    %1 = arith.extui %0 : i1 to i32
    %c0_i32_0 = arith.constant 0 : i32
    %2 = arith.cmpi ne, %1, %c0_i32_0 : i32
    scf.if %2 {
      %c0_12 = arith.constant 0 : index
      %c0_13 = arith.constant 0 : index
      %c0_14 = arith.constant 0 : index
      %9 = vector.load %arg5[%c0_12, %c0_13, %c0_14] : memref<2x1x128xf32, #tpu.memory_space<vmem>>, vector<2x1x128xf32>
      %10 = vector.shape_cast %9 : vector<2x1x128xf32> to vector<2x1x128xf32>
      %11 = vector.broadcast %10 : vector<2x1x128xf32> to vector<2x8x128xf32>
      %c0_15 = arith.constant 0 : index
      %c0_16 = arith.constant 0 : index
      %c0_17 = arith.constant 0 : index
      %12 = vector.load %arg6[%c0_15, %c0_16, %c0_17] : memref<2x8x128xf32, #tpu.memory_space<vmem>>, vector<2x8x128xf32>
      tpu.vector_store %arg6[%c0_15, %c0_16, %c0_17], %11 {strides = array<i32>} : memref<2x8x128xf32, #tpu.memory_space<vmem>>, vector<2x8x128xf32>,
    } else {
    }
    %c0 = arith.constant 0 : index
    %c0_1 = arith.constant 0 : index
    %c0_2 = arith.constant 0 : index
    %3 = vector.load %arg6[%c0, %c0_1, %c0_2] : memref<2x8x128xf32, #tpu.memory_space<vmem>>, vector<2x8x128xf32>
    %c0_3 = arith.constant 0 : index
    %c0_4 = arith.constant 0 : index
    %c0_5 = arith.constant 0 : index
    %4 = vector.load %arg3[%c0_3, %c0_4, %c0_5] : memref<2x8x128xf32, #tpu.memory_space<vmem>>, vector<2x8x128xf32>
    %c0_6 = arith.constant 0 : index
    %c0_7 = arith.constant 0 : index
    %c0_8 = arith.constant 0 : index
    %5 = vector.load %arg4[%c0_6, %c0_7, %c0_8] : memref<2x128x128xf32, #tpu.memory_space<vmem>>, vector<2x128x128xf32>
    "tpu.trace_start"() <{level = 10 : i32, message = "gmk,gkn->gmn"}> : () -> ()
    %cst = arith.constant dense<0.000000e+00> : vector<2x8x128xf32>
    %6 = tpu.matmul %4, %5, %cst {dimension_numbers = #tpu.dot_dimension_numbers<[2], [1], [1], [2], [0, 0, 0, 1, 1, 2], [0], [0]>} : vector<2x8x128xf32>, vector<2x128x128xf32>, vector<2x8x128xf32> -> vector<2x8x128xf32>
    "tpu.trace_stop"() : () -> ()
    %7 = arith.addf %3, %6 : vector<2x8x128xf32>
    %c0_9 = arith.constant 0 : index
    %c0_10 = arith.constant 0 : index
    %c0_11 = arith.constant 0 : index
    %8 = vector.load %arg6[%c0_9, %c0_10, %c0_11] : memref<2x8x128xf32, #tpu.memory_space<vmem>>, vector<2x8x128xf32>
    tpu.vector_store %arg6[%c0_9, %c0_10, %c0_11], %7 {strides = array<i32>} : memref<2x8x128xf32, #tpu.memory_space<vmem>>, vector<2x8x128xf32>,
    return
  }
  func.func @transform_0(%arg0: i32, %arg1: i32, %arg2: i32) -> (i32, i32, i32) {
    %c0_i32 = arith.constant 0 : i32
    %c0_i32_0 = arith.constant 0 : i32
    return %c0_i32, %arg0, %arg2 : i32, i32, i32
  }
  func.func @transform_1(%arg0: i32, %arg1: i32, %arg2: i32) -> (i32, i32, i32) {
    %c0_i32 = arith.constant 0 : i32
    %c0_i32_0 = arith.constant 0 : i32
    return %c0_i32, %arg2, %arg1 : i32, i32, i32
  }
  func.func @transform_2(%arg0: i32, %arg1: i32, %arg2: i32) -> (i32, i32, i32) {
    %c0_i32 = arith.constant 0 : i32
    %c0_i32_0 = arith.constant 0 : i32
    %c0_i32_1 = arith.constant 0 : i32
    return %c0_i32, %c0_i32_0, %arg1 : i32, i32, i32
  }
  func.func @transform_3(%arg0: i32, %arg1: i32, %arg2: i32) -> (i32, i32, i32) {
    %c0_i32 = arith.constant 0 : i32
    %c0_i32_0 = arith.constant 0 : i32
    return %c0_i32, %arg0, %arg1 : i32, i32, i32
  }
}

</mosaic_0001>

<llo_original>
// kernel: grouped_linear.1
$region0: #{grouped_linear.1}
  #allocation0 [shape = 'u32[]', space=smem, size = 0x4, offset = 0x4, fixed_abs, tag = 'smem constant byte address 0x4 - core index']
  #allocation1 [shape = 'u32[72,128]{1,0:T(1,128)}', space=vmem, size = 0x9000, scoped, tag = 'internal scratch']
  %s0 = inlined_call_operand.vmem [shape: f32[2,8,128], index: 0, kind: input, shape index: {}]
  %s1 = inlined_call_operand.hbm [shape: f32[2,128,128], index: 1, kind: input, shape index: {}]
  %s2 = inlined_call_operand.vmem [shape: f32[2,1,128], index: 2, kind: input, shape index: {}]
  %s3 = inlined_call_operand.hbm [shape: f32[2,8,128], index: 3, kind: output, shape index: {}]
  %s4 = sld [smem:[#allocation0]]
  $region30: #{grouped_linear.1} parent=0
    _
  %s6 = ssub.s32 1, %s4
  %s7 = scalar_select 0, %s6, %s4
  $region1: #{grouped_linear.1} parent=0
    #allocation2 [shape = 'u8[131072]{0}', space=vmem, size = 0x20000, scoped, tag = 'input window, operand 1, single buffered']
    #allocation3 [shape = 's32[1]{0}', space=sflag, size = 0x4, scoped, tag = 'scoped memory for grouped_linear.1']
    #allocation4 [shape = 's32[1]{0}', space=sflag, size = 0x4, scoped, tag = 'scoped memory for grouped_linear.1']
    #allocation5 [shape = 'u8[8192]{0}', space=vmem, size = 0x2000, scoped, tag = 'output window, operand 0, single buffered']
    %8 = vsyncpa [#allocation3], 0
    %9 = vsyncpa [#allocation4], 0
    // Predicated region
    $region2: #{grouped_linear.1} parent=1 // pred_check
      _
    $region3: #{grouped_linear.1} parent=1 // pred_check_branch
      %11 = sbr.rel (0) target = $region5
    $region4: #{grouped_linear.1} parent=1 // pred_region
      _
    $region5: #{grouped_linear.1} parent=1 // pred_fallthru
      _
    // Predicated region
    $region6: #{grouped_linear.1} parent=1 // pred_check
      _
    $region7: #{grouped_linear.1} parent=1 // pred_check_branch
      %13 = sbr.rel (0) target = $region9
    $region8: #{grouped_linear.1} parent=1 // pred_region
      %15 = vsyncadd [#allocation3], 0
      %s16 = sshll.u32 %s1, 4
      %s17 = int_to_ptr.hbm [resolvable:$true] %s16
      %s18 = sshll.u32 [#allocation2], 4
      %s19 = int_to_ptr.vmem [resolvable:$true] %s18
      %24 = dma.hbm_to_vmem [thread:$0]  %s17, 4096, %s19, [#allocation3], 128, 128, 8
    $region9: #{grouped_linear.1} parent=1 // pred_fallthru
      _
    // Predicated region
    $region10: #{grouped_linear.1} parent=1 // pred_check
      _
    $region11: #{grouped_linear.1} parent=1 // pred_check_branch
      %26 = sbr.rel (0) target = $region13
    $region12: #{grouped_linear.1} parent=1 // pred_region
      _
    $region13: #{grouped_linear.1} parent=1 // pred_fallthru
      _
    // Predicated region
    $region14: #{grouped_linear.1} parent=1 // pred_check
      _
    $region15: #{grouped_linear.1} parent=1 // pred_check_branch
      %28 = sbr.rel (0) target = $region17
    $region16: #{grouped_linear.1} parent=1 // pred_region
      %30 = dma.done [#allocation3], 4096
    $region17: #{grouped_linear.1} parent=1 // pred_fallthru
      _
    %p31 = scmp.eq.s32.totalorder 0, 0
    // Predicated region
    $region18: #{grouped_linear.1} parent=1 // pred_check
      %p32 = pneg %p31
    $region19: #{grouped_linear.1} parent=1 // pred_check_branch
      %34 = sbr.rel (%p32) target = $region21
    $region20: #{grouped_linear.1} parent=1 // pred_region
      %v35 = vld [vmem:[%s2] sm:$0x1]
      %v36 = vld [vmem:[%s2 + $0x1] sm:$0x1]
      %v39 = vperm.slane %v35, 0
      %v40 = vperm.slane %v36, 0
      %43 = vst [vmem:[#allocation5] sm:$0xff] %v39
      %44 = vst [vmem:[#allocation5 + $0x8] sm:$0xff] %v40
    $region21: #{grouped_linear.1} parent=1 // pred_fallthru
      _
    %v45 = vld [vmem:[#allocation5] sm:$0xff]
    %v46 = vld [vmem:[#allocation5 + $0x8] sm:$0xff]
    %v47 = vld [vmem:[%s0] sm:$0xff]
    %v48 = vld [vmem:[%s0 + $0x8] sm:$0xff]
    %v49 = vld [vmem:[#allocation2] sm:$0xff]
    %v50 = vld [vmem:[#allocation2 + $0x8] sm:$0xff]
    %v51 = vld [vmem:[#allocation2 + $0x10] sm:$0xff]
    %v52 = vld [vmem:[#allocation2 + $0x18] sm:$0xff]
    %v53 = vld [vmem:[#allocation2 + $0x20] sm:$0xff]
    %v54 = vld [vmem:[#allocation2 + $0x28] sm:$0xff]
    %v55 = vld [vmem:[#allocation2 + $0x30] sm:$0xff]
    %v56 = vld [vmem:[#allocation2 + $0x38] sm:$0xff]
    %v57 = vld [vmem:[#allocation2 + $0x40] sm:$0xff]
    %v58 = vld [vmem:[#allocation2 + $0x48] sm:$0xff]
    %v59 = vld [vmem:[#allocation2 + $0x50] sm:$0xff]
    %v60 = vld [vmem:[#allocation2 + $0x58] sm:$0xff]
    %v61 = vld [vmem:[#allocation2 + $0x60] sm:$0xff]
    %v62 = vld [vmem:[#allocation2 + $0x68] sm:$0xff]
    %v63 = vld [vmem:[#allocation2 + $0x70] sm:$0xff]
    %v64 = vld [vmem:[#allocation2 + $0x78] sm:$0xff]
    %v65 = vld [vmem:[#allocation2 + $0x80] sm:$0xff]
    %v66 = vld [vmem:[#allocation2 + $0x88] sm:$0xff]
    %v67 = vld [vmem:[#allocation2 + $0x90] sm:$0xff]
    %v68 = vld [vmem:[#allocation2 + $0x98] sm:$0xff]
    %v69 = vld [vmem:[#allocation2 + $0xa0] sm:$0xff]
    %v70 = vld [vmem:[#allocation2 + $0xa8] sm:$0xff]
    %v71 = vld [vmem:[#allocation2 + $0xb0] sm:$0xff]
    %v72 = vld [vmem:[#allocation2 + $0xb8] sm:$0xff]
    %v73 = vld [vmem:[#allocation2 + $0xc0] sm:$0xff]
    %v74 = vld [vmem:[#allocation2 + $0xc8] sm:$0xff]
    %v75 = vld [vmem:[#allocation2 + $0xd0] sm:$0xff]
    %v76 = vld [vmem:[#allocation2 + $0xd8] sm:$0xff]
    %v77 = vld [vmem:[#allocation2 + $0xe0] sm:$0xff]
    %v78 = vld [vmem:[#allocation2 + $0xe8] sm:$0xff]
    %v79 = vld [vmem:[#allocation2 + $0xf0] sm:$0xff]
    %v80 = vld [vmem:[#allocation2 + $0xf8] sm:$0xff]
    %81 = vmatpush.msra.mxu0 %v64
    %82 = vmatpush.msra.mxu0 %v63
    %83 = vmatpush.msra.mxu0 %v62
    %84 = vmatpush.msra.mxu0 %v61
    %85 = vmatpush.msra.mxu0 %v60
    %86 = vmatpush.msra.mxu0 %v59
    %87 = vmatpush.msra.mxu0 %v58
    %88 = vmatpush.msra.mxu0 %v57
    %89 = vmatpush.msra.mxu0 %v56
    %90 = vmatpush.msra.mxu0 %v55
    %91 = vmatpush.msra.mxu0 %v54
    %92 = vmatpush.msra.mxu0 %v53
    %93 = vmatpush.msra.mxu0 %v52
    %94 = vmatpush.msra.mxu0 %v51
    %95 = vmatpush.msra.mxu0 %v50
    %96 = vmatpush.msra.mxu0 %v49
    %97 = vmatmul.f32.gmra.mxu0 %v47
    %v98 = vpop.f32.mrf.mxu0
    %v99 = vadd.f32 0.0, %v98
    %100 = vdwg.mxu0
    %101 = vmatpush.msra.mxu0 %v80
    %102 = vmatpush.msra.mxu0 %v79
    %103 = vmatpush.msra.mxu0 %v78
    %104 = vmatpush.msra.mxu0 %v77
    %105 = vmatpush.msra.mxu0 %v76
    %106 = vmatpush.msra.mxu0 %v75
    %107 = vmatpush.msra.mxu0 %v74
    %108 = vmatpush.msra.mxu0 %v73
    %109 = vmatpush.msra.mxu0 %v72
    %110 = vmatpush.msra.mxu0 %v71
    %111 = vmatpush.msra.mxu0 %v70
    %112 = vmatpush.msra.mxu0 %v69
    %113 = vmatpush.msra.mxu0 %v68
    %114 = vmatpush.msra.mxu0 %v67
    %115 = vmatpush.msra.mxu0 %v66
    %116 = vmatpush.msra.mxu0 %v65
    %117 = vmatmul.f32.gmra.mxu0 %v48
    %v118 = vpop.f32.mrf.mxu0
    %v119 = vadd.f32 0.0, %v118
    %120 = vdwg.mxu0
    %v121 = vadd.f32 %v45, %v99
    %v122 = vadd.f32 %v46, %v119
    %123 = vst [vmem:[#allocation5] sm:$0xff] %v121
    %124 = vst [vmem:[#allocation5 + $0x8] sm:$0xff] %v122
    // Predicated region
    $region22: #{grouped_linear.1} parent=1 // pred_check
      _
    $region23: #{grouped_linear.1} parent=1 // pred_check_branch
      %126 = sbr.rel (0) target = $region25
    $region24: #{grouped_linear.1} parent=1 // pred_region
      %128 = vsyncadd [#allocation4], 0
      %s129 = sshll.u32 [#allocation5], 4
      %s130 = int_to_ptr.vmem [resolvable:$true] %s129
      %s131 = sshll.u32 %s3, 4
      %s132 = int_to_ptr.hbm [resolvable:$true] %s131
      %137 = dma.vmem_to_hbm [thread:$0]  %s130, 256, %s132, [#allocation4], 128, 128, 8
    $region25: #{grouped_linear.1} parent=1 // pred_fallthru
      _
    // Predicated region
    $region26: #{grouped_linear.1} parent=1 // pred_check
      _
    $region27: #{grouped_linear.1} parent=1 // pred_check_branch
      %139 = sbr.rel (0) target = $region29
    $region28: #{grouped_linear.1} parent=1 // pred_region
      %141 = dma.done [#allocation4], 256
    $region29: #{grouped_linear.1} parent=1 // pred_fallthru
      _
    %142 = vsyncpa [#allocation3], 1
    %143 = vsyncpa [#allocation4], 1

</llo_original>
